<compile_context>
chip_gen: v5e
topology: v5e:2x2
jax: 0.10.0
libtpu: 0.0.40
codegen_flags: <defaults>
</compile_context>

<pallas_src>
import functools

import jax
import jax.numpy as jnp
import numpy as np
from jax.experimental import pallas as pl
from jax.experimental.pallas import tpu as pltpu


def _eca_kernel(x_ref, w_ref, o_ref, ybuf, *, hw, c, k, pad, p8):
    """One grid step over a (bN, C, HWp) block of x.

    x_ref : (bN, C, HWp) input block (VMEM)
    w_ref : (k,) float32 conv taps (SMEM)
    o_ref : (bN, C, HWp) output block (VMEM)
    ybuf  : (bN, C + 2*p8, 1) float32 VMEM scratch (zero-padded pooled means)
    """
    xf = x_ref[...].astype(jnp.float32)                 # f32 accumulation path

    # Global average pool over the (padded) spatial axis.  Padded lanes are
    # zeros, so summing over HWp and dividing by the true hw is exact.
    means = jnp.sum(xf, axis=2, keepdims=True) * (1.0 / hw)   # (bN, C, 1)

    # Zero-padded staging buffer: rows [p8, p8 + C) hold the pooled means,
    # everything else stays zero -> implements Conv1d's zero padding.
    ybuf[...] = jnp.zeros_like(ybuf)
    ybuf[:, p8:p8 + c, :] = means

    # k-tap channel conv as k shifted-and-weighted adds (pure VPU MACs); the
    # "shift" is just a re-sliced read of the staging buffer.
    conv = jnp.zeros_like(means)
    for t in range(k):                                   # k is tiny and static
        off = p8 - pad + t                               # >= 0 since p8 >= pad
        conv = conv + w_ref[t] * ybuf[:, off:off + c, :]

    gate = jax.nn.sigmoid(conv)                          # (bN, C, 1) f32

    # Broadcast the gate over the spatial axis and write back (lane-dense).
    o_ref[...] = (xf * gate).astype(o_ref.dtype)


def eca_layer(x, conv_weight, *, block_bytes_target=4 * 1024 * 1024):
    """x: (N, C, H, W); conv_weight: (k,) taps of Conv1d(1, 1, k, bias=False)."""
    n, c, h, w = x.shape
    hw = h * w
    k = conv_weight.shape[0]
    pad = (k - 1) // 2
    p8 = max(8, ((pad + 7) // 8) * 8)        # sublane-aligned headroom >= pad

    # Lane-dense spatial axis: pad HW to a multiple of 128 only when needed.
    # Zero padding adds nothing to the pooled sum (we divide by the true hw)
    # and the padded outputs are sliced off below.
    hwp = ((hw + 127) // 128) * 128
    x_flat = x.reshape(n, c, hw)
    if hwp != hw:
        x_flat = jnp.pad(x_flat, ((0, 0), (0, 0), (0, hwp - hw)))

    # Pack several batch elements per grid step so each DMA is a few MiB.
    bytes_per_elem = c * hwp * x.dtype.itemsize
    bn = int(max(1, min(n, block_bytes_target // max(1, bytes_per_elem))))
    n_blocks = pl.cdiv(n, bn)

    # VMEM budget: double-buffered input + output blocks, plus slack.
    block_bytes = bn * bytes_per_elem
    vmem_limit = int(min(max(4 * block_bytes + (4 << 20), 32 << 20), 100 << 20))
    # TODO(synk): for N=1 on v7x, additionally tile HW (pool-then-scale) so the
    # second TensorCore is not idle; single batch-block grid keeps one TC busy.

    taps = conv_weight.astype(jnp.float32)

    kernel = functools.partial(_eca_kernel, hw=hw, c=c, k=k, pad=pad, p8=p8)

    out_flat = pl.pallas_call(
        kernel,
        out_shape=jax.ShapeDtypeStruct((n, c, hwp), x.dtype),
        grid_spec=pltpu.PrefetchScalarGridSpec(
            num_scalar_prefetch=0,
            grid=(n_blocks,),
            in_specs=[
                pl.BlockSpec((bn, c, hwp), lambda i: (i, 0, 0)),
                pl.BlockSpec(memory_space=pltpu.MemorySpace.SMEM),
            ],
            out_specs=pl.BlockSpec((bn, c, hwp), lambda i: (i, 0, 0)),
            scratch_shapes=[pltpu.VMEM((bn, c + 2 * p8, 1), jnp.float32)],
        ),
        compiler_params=pltpu.CompilerParams(
            dimension_semantics=("parallel",),
            vmem_limit_bytes=vmem_limit,
        ),
    )(x_flat, taps)

    if hwp != hw:
        out_flat = out_flat[:, :, :hw]
    return out_flat.reshape(n, c, h, w)


def _reference(x, conv_weight):
    """Pure-JAX reference mirroring the PyTorch module."""
    n, c, h, w = x.shape
    k = conv_weight.shape[0]
    pad = (k - 1) // 2
    y = jnp.mean(x, axis=(2, 3))                                   # (N, C)
    yp = jnp.pad(y, ((0, 0), (pad, pad)))                          # (N, C+2p)
    conv = jnp.stack(
        [jnp.sum(yp[:, ci:ci + k] * conv_weight, axis=-1) for ci in range(c)],
        axis=-1)                                                   # (N, C)
    gate = jax.nn.sigmoid(conv)
    return x * gate[:, :, None, None]


if __name__ == "__main__":
    key = jax.random.PRNGKey(0)
    kx, kw = jax.random.split(key)

    N, C, H, W = 2, 4, 16, 16
    kernel_size = 3

    x = jax.random.normal(kx, (N, C, H, W), dtype=jnp.float32)

    # Conv1d(1, 1, k, bias=False) weight, uniform in [-1/sqrt(k), 1/sqrt(k)]
    # like PyTorch's default init.
    bound = 1.0 / np.sqrt(kernel_size)
    conv_weight = jax.random.uniform(
        kw, (kernel_size,), dtype=jnp.float32, minval=-bound, maxval=bound)

    out = eca_layer(x, conv_weight)
    out = jax.block_until_ready(out)

    ref = _reference(x, conv_weight)
    np.testing.assert_allclose(np.asarray(out), np.asarray(ref),
                               rtol=1e-5, atol=1e-5)
    print("KERNEL_OK")
</pallas_src>

<mosaic_0001>
module attributes {stable_mosaic.version = 11 : i64} {
  func.func @_eca_kernel(%arg0: i32, %arg1: memref<2x4x256xf32, #tpu.memory_space<vmem>>, %arg2: memref<3xf32, #tpu.memory_space<smem>>, %arg3: memref<2x4x256xf32, #tpu.memory_space<vmem>>, %arg4: memref<2x20x1xf32, #tpu.memory_space<vmem>>) attributes {dimension_semantics = [#tpu.dimension_semantics<parallel>], iteration_bounds = array<i64: 1>, scalar_prefetch = 0 : i64, scratch_operands = 1 : i64, tpu.core_type = #tpu.core_type<tc>, window_params = [{transform_indices = @transform_0, window_bounds = array<i64: 2, 4, 256>}, {transform_indices = @transform_1, window_bounds = array<i64: 3>}, {transform_indices = @transform_2, window_bounds = array<i64: 2, 4, 256>}]} {
    %c0 = arith.constant 0 : index
    %c0_0 = arith.constant 0 : index
    %c0_1 = arith.constant 0 : index
    %0 = vector.load %arg1[%c0, %c0_0, %c0_1] : memref<2x4x256xf32, #tpu.memory_space<vmem>>, vector<2x4x256xf32>
    %cst = arith.constant dense<0.000000e+00> : vector<2x4xf32>
    %1 = vector.multi_reduction <add>, %0, %cst [2] : vector<2x4x256xf32> to vector<2x4xf32>
    %2 = vector.shape_cast %1 : vector<2x4xf32> to vector<2x4x1xf32>
    %cst_2 = arith.constant 3.906250e-03 : f32
    %3 = vector.broadcast %cst_2 : f32 to vector<2x4x1xf32>
    %4 = arith.mulf %2, %3 : vector<2x4x1xf32>
    %cst_3 = arith.constant 0.000000e+00 : f32
    %5 = vector.broadcast %cst_3 : f32 to vector<2x20x1xf32>
    %c0_4 = arith.constant 0 : index
    %c0_5 = arith.constant 0 : index
    %c0_6 = arith.constant 0 : index
    %6 = vector.load %arg4[%c0_4, %c0_5, %c0_6] : memref<2x20x1xf32, #tpu.memory_space<vmem>>, vector<2x20x1xf32>
    tpu.vector_store %arg4[%c0_4, %c0_5, %c0_6], %5 {strides = array<i32>} : memref<2x20x1xf32, #tpu.memory_space<vmem>>, vector<2x20x1xf32>,
    %c0_7 = arith.constant 0 : index
    %c8 = arith.constant 8 : index
    %c0_8 = arith.constant 0 : index
    %7 = vector.load %arg4[%c0_7, %c8, %c0_8] : memref<2x20x1xf32, #tpu.memory_space<vmem>>, vector<2x4x1xf32>
    tpu.vector_store %arg4[%c0_7, %c8, %c0_8], %4 {strides = array<i32>} : memref<2x20x1xf32, #tpu.memory_space<vmem>>, vector<2x4x1xf32>,
    %cst_9 = arith.constant 0.000000e+00 : f32
    %8 = vector.broadcast %cst_9 : f32 to vector<2x4x1xf32>
    %c0_10 = arith.constant 0 : index
    %9 = memref.load %arg2[%c0_10] : memref<3xf32, #tpu.memory_space<smem>>
    %c0_11 = arith.constant 0 : index
    %c7 = arith.constant 7 : index
    %c0_12 = arith.constant 0 : index
    %10 = vector.load %arg4[%c0_11, %c7, %c0_12] : memref<2x20x1xf32, #tpu.memory_space<vmem>>, vector<2x4x1xf32>
    %11 = vector.broadcast %9 : f32 to vector<2x4x1xf32>
    %12 = arith.mulf %11, %10 : vector<2x4x1xf32>
    %13 = arith.addf %8, %12 : vector<2x4x1xf32>
    %c1 = arith.constant 1 : index
    %14 = memref.load %arg2[%c1] : memref<3xf32, #tpu.memory_space<smem>>
    %c0_13 = arith.constant 0 : index
    %c8_14 = arith.constant 8 : index
    %c0_15 = arith.constant 0 : index
    %15 = vector.load %arg4[%c0_13, %c8_14, %c0_15] : memref<2x20x1xf32, #tpu.memory_space<vmem>>, vector<2x4x1xf32>
    %16 = vector.broadcast %14 : f32 to vector<2x4x1xf32>
    %17 = arith.mulf %16, %15 : vector<2x4x1xf32>
    %18 = arith.addf %13, %17 : vector<2x4x1xf32>
    %c2 = arith.constant 2 : index
    %19 = memref.load %arg2[%c2] : memref<3xf32, #tpu.memory_space<smem>>
    %c0_16 = arith.constant 0 : index
    %c9 = arith.constant 9 : index
    %c0_17 = arith.constant 0 : index
    %20 = vector.load %arg4[%c0_16, %c9, %c0_17] : memref<2x20x1xf32, #tpu.memory_space<vmem>>, vector<2x4x1xf32>
    %21 = vector.broadcast %19 : f32 to vector<2x4x1xf32>
    %22 = arith.mulf %21, %20 : vector<2x4x1xf32>
    %23 = arith.addf %18, %22 : vector<2x4x1xf32>
    %24 = arith.negf %23 : vector<2x4x1xf32>
    %25 = math.exp %24 : vector<2x4x1xf32>
    %cst_18 = arith.constant 1.000000e+00 : f32
    %26 = vector.broadcast %cst_18 : f32 to vector<2x4x1xf32>
    %27 = arith.addf %26, %25 : vector<2x4x1xf32>
    %28 = arith.divf %26, %27 : vector<2x4x1xf32>
    %29 = vector.broadcast %28 : vector<2x4x1xf32> to vector<2x4x256xf32>
    %30 = arith.mulf %0, %29 : vector<2x4x256xf32>
    %c0_19 = arith.constant 0 : index
    %c0_20 = arith.constant 0 : index
    %c0_21 = arith.constant 0 : index
    %31 = vector.load %arg3[%c0_19, %c0_20, %c0_21] : memref<2x4x256xf32, #tpu.memory_space<vmem>>, vector<2x4x256xf32>
    tpu.vector_store %arg3[%c0_19, %c0_20, %c0_21], %30 {strides = array<i32>} : memref<2x4x256xf32, #tpu.memory_space<vmem>>, vector<2x4x256xf32>,
    return
  }
  func.func @transform_0(%arg0: i32) -> (i32, i32, i32) {
    %c0_i32 = arith.constant 0 : i32
    %c0_i32_0 = arith.constant 0 : i32
    %c0_i32_1 = arith.constant 0 : i32
    return %arg0, %c0_i32, %c0_i32_0 : i32, i32, i32
  }
  func.func @transform_1(%arg0: i32) -> i32 {
    %c0_i32 = arith.constant 0 : i32
    %c0_i32_0 = arith.constant 0 : i32
    return %c0_i32 : i32
  }
  func.func @transform_2(%arg0: i32) -> (i32, i32, i32) {
    %c0_i32 = arith.constant 0 : i32
    %c0_i32_0 = arith.constant 0 : i32
    %c0_i32_1 = arith.constant 0 : i32
    return %arg0, %c0_i32, %c0_i32_0 : i32, i32, i32
  }
}

</mosaic_0001>

<llo_original>
// kernel: tpu_custom_call.1
$region0: #{tpu_custom_call.1}
  #allocation0 [shape = 'u32[]', space=smem, size = 0x4, offset = 0x4, fixed_abs, tag = 'smem constant byte address 0x4 - core index']
  #allocation1 [shape = 'u32[72,128]{1,0:T(1,128)}', space=vmem, size = 0x9000, scoped, tag = 'internal scratch']
  #allocation2 [shape = 'f32[2,20,1]{2,1,0:T(8,128)}', space=vmem, size = 0x6000, scoped, tag = 'scratch operand']
  %s0 = inlined_call_operand.hbm [shape: f32[2,4,256], index: 0, kind: input, shape index: {}]
  %s1 = inlined_call_operand.hbm [shape: f32[3], index: 1, kind: input, shape index: {}]
  %s2 = inlined_call_operand.hbm [shape: f32[2,4,256], index: 2, kind: output, shape index: {}]
  %s3 = sld [smem:[#allocation0]]
  $region26: #{tpu_custom_call.1} parent=0
    _
  %s5 = ssub.s32 1, %s3
  %s6 = scalar_select 0, %s5, %s3
  $region1: #{tpu_custom_call.1} parent=0
    #allocation3 [shape = 'u8[8192]{0}', space=vmem, size = 0x2000, scoped, tag = 'input window, operand 0, single buffered']
    #allocation4 [shape = 's32[1]{0}', space=sflag, size = 0x4, scoped, tag = 'scoped memory for tpu_custom_call.1']
    #allocation5 [shape = 's32[1]{0}', space=sflag, size = 0x4, scoped, tag = 'scoped memory for tpu_custom_call.1']
    #allocation6 [shape = 's32[1]{0}', space=sflag, size = 0x4, scoped, tag = 'scoped memory for tpu_custom_call.1']
    #allocation7 [shape = 'u8[512]{0}', space=smem, size = 0x200, scoped, tag = 'input window, operand 1, single buffered']
    #allocation8 [shape = 'u8[8192]{0}', space=vmem, size = 0x2000, scoped, tag = 'output window, operand 0, single buffered']
    %7 = vsyncpa [#allocation4], 0
    %8 = vsyncpa [#allocation6], 0
    %9 = vsyncpa [#allocation5], 0
    // Predicated region
    $region2: #{tpu_custom_call.1} parent=1 // pred_check
      _
    $region3: #{tpu_custom_call.1} parent=1 // pred_check_branch
      %11 = sbr.rel (0) target = $region5
    $region4: #{tpu_custom_call.1} parent=1 // pred_region
      %13 = vsyncadd [#allocation4], 0
      %s14 = sshll.u32 %s0, 4
      %s15 = int_to_ptr.hbm [resolvable:$true] %s14
      %s16 = sshll.u32 [#allocation3], 4
      %s17 = int_to_ptr.vmem [resolvable:$true] %s16
      %22 = dma.hbm_to_vmem [thread:$0]  %s15, 256, %s17, [#allocation4], 128, 128, 8
    $region5: #{tpu_custom_call.1} parent=1 // pred_fallthru
      _
    // Predicated region
    $region6: #{tpu_custom_call.1} parent=1 // pred_check
      _
    $region7: #{tpu_custom_call.1} parent=1 // pred_check_branch
      %24 = sbr.rel (0) target = $region9
    $region8: #{tpu_custom_call.1} parent=1 // pred_region
      %26 = vsyncadd [#allocation6], 0
      %s28 = sshll.u32 %s1, 4
      %s29 = int_to_ptr.hbm [resolvable:$true] %s28
      %31 = dma.hbm_to_smem %s29, 16, [#allocation7], [#allocation6]
    $region9: #{tpu_custom_call.1} parent=1 // pred_fallthru
      _
    // Predicated region
    $region10: #{tpu_custom_call.1} parent=1 // pred_check
      _
    $region11: #{tpu_custom_call.1} parent=1 // pred_check_branch
      %33 = sbr.rel (0) target = $region13
    $region12: #{tpu_custom_call.1} parent=1 // pred_region
      %35 = dma.done [#allocation4], 256
    $region13: #{tpu_custom_call.1} parent=1 // pred_fallthru
      _
    // Predicated region
    $region14: #{tpu_custom_call.1} parent=1 // pred_check
      _
    $region15: #{tpu_custom_call.1} parent=1 // pred_check_branch
      %37 = sbr.rel (0) target = $region17
    $region16: #{tpu_custom_call.1} parent=1 // pred_region
      %39 = dma.done [#allocation6], 16
    $region17: #{tpu_custom_call.1} parent=1 // pred_fallthru
      _
    %40 = sfence
    %v41 = vld [vmem:[#allocation3] sm:$0xff]
    %v42 = vld [vmem:[#allocation3 + $0x8] sm:$0xff]
    %45 = vst [vmem:[#allocation1] ss:$2 sm:$0xff] %v41
    %v46 = vld.sshfl [vmem:[#allocation1] sm:$0xff pattern:$0x75316420]
    %v47 = vld.sshfl [vmem:[#allocation1 + $0x8] sm:$0xff pattern:$0x75316420]
    %s48 = scalar_lea.vmem [#allocation1], 16
    %49 = vst [vmem:[%s48] ss:$2 sm:$0xff] %v42
    %v50 = vld.sshfl [vmem:[#allocation1 + $0x10] sm:$0xff pattern:$0x75316420]
    %v51 = vld.sshfl [vmem:[#allocation1 + $0x18] sm:$0xff pattern:$0x75316420]
    %vm56 = vcmask 1043456
    %v57 = vsel %vm56, %v46, 0.0
    %v58 = vsel %vm56, %v47, 0.0
    %v59 = vadd.f32 %v57, %v58
    %60 = vadd.xlane.f32.xlu0 %v59
    %v61 = vpop.xlane.xlu0 %60
    %v62 = vsel %vm56, %v50, 0.0
    %v63 = vsel %vm56, %v51, 0.0
    %v64 = vadd.f32 %v62, %v63
    %65 = vadd.xlane.f32.xlu0 %v64
    %v66 = vpop.xlane.xlu0 %65
    %v67 = vmul.f32 %v61, 0.00390625
    %v68 = vmul.f32 %v66, 0.00390625
    %vm69 = vcmask 7168
    %70 = vst.msk [vmem:[#allocation2] sm:$0xff] %vm69, 0.0
    %71 = vst.msk [vmem:[#allocation2 + $0x8] sm:$0xff] %vm69, 0.0
    %vm72 = vcmask 3072
    %73 = vst.msk [vmem:[#allocation2 + $0x10] sm:$0xf] %vm72, 0.0
    %74 = vst.msk [vmem:[#allocation2 + $0x18] sm:$0xff] %vm69, 0.0
    %75 = vst.msk [vmem:[#allocation2 + $0x20] sm:$0xff] %vm69, 0.0
    %76 = vst.msk [vmem:[#allocation2 + $0x28] sm:$0xf] %vm72, 0.0
    %77 = vst.msk [vmem:[#allocation2 + $0x8] sm:$0xf] %vm72, %v67
    %78 = vst.msk [vmem:[#allocation2 + $0x20] sm:$0xf] %vm72, %v68
    %s79 = sld [smem:[#allocation7]]
    %v80 = vld [vmem:[#allocation2 + $0x7] sm:$0xf]
    %v81 = vld [vmem:[#allocation2 + $0x1f] sm:$0xf]
    %v82 = vstv %s79
    %v83 = vmul.f32 %v82, %v80
    %v84 = vmul.f32 %v82, %v81
    %v85 = vadd.f32 %v83, 0.0
    %v86 = vadd.f32 %v84, 0.0
    %s87 = sld [smem:[#allocation7 + $0x1]]
    %v88 = vld [vmem:[#allocation2 + $0x8] sm:$0xf]
    %v89 = vld [vmem:[#allocation2 + $0x20] sm:$0xf]
    %v90 = vstv %s87
    %v91 = vmul.f32 %v90, %v88
    %v92 = vmul.f32 %v90, %v89
    %v93 = vadd.f32 %v85, %v91
    %v94 = vadd.f32 %v86, %v92
    %s95 = sld [smem:[#allocation7 + $0x2]]
    %v96 = vld [vmem:[#allocation2 + $0x9] sm:$0xf]
    %v97 = vld [vmem:[#allocation2 + $0x21] sm:$0xf]
    %v98 = vstv %s95
    %v99 = vmul.f32 %v98, %v96
    %v100 = vmul.f32 %v98, %v97
    %v101 = vadd.f32 %v93, %v99
    %v102 = vadd.f32 %v94, %v100
    %v103 = vxor.u32 %v101, 2147483648
    %v104 = vxor.u32 %v102, 2147483648
    %v105 = vmul.f32 %v103, 1.442695
    %v106 = vpow.pop %v105
    %v107 = vmul.f32 %v104, 1.442695
    %v108 = vpow.pop %v107
    %v109 = vadd.f32 %v106, 1.0
    %v110 = vadd.f32 %v108, 1.0
    %v111 = vrcp.pop %v109
    %v112 = vmul.f32 %v109, %v111
    %v113 = vsub.f32 1.0, %v112
    %v114 = vmul.f32 %v111, %v113
    %v115 = vadd.f32 %v111, %v114
    %vm116 = vweird.f32 %v109
    %vm117 = vweird.f32 %v111
    %vm118 = vmor %vm116, %vm117
    %v119 = vsel %vm118, %v111, %v115
    %v120 = vand.u32 2147483647, %v109
    %vm121 = vcmp.eq.f32.partialorder %v120, 8.507059e+37
    %v122 = vand.u32 %v109, 2147483648
    %v123 = vor.u32 1.1754944e-38, %v122
    %v124 = vsel %vm121, %v123, %v119
    %v125 = vmul.f32 1.0, %v124
    %v126 = vrcp.pop %v110
    %v127 = vmul.f32 %v110, %v126
    %v128 = vsub.f32 1.0, %v127
    %v129 = vmul.f32 %v126, %v128
    %v130 = vadd.f32 %v126, %v129
    %vm131 = vweird.f32 %v110
    %vm132 = vweird.f32 %v126
    %vm133 = vmor %vm131, %vm132
    %v134 = vsel %vm133, %v126, %v130
    %v135 = vand.u32 2147483647, %v110
    %vm136 = vcmp.eq.f32.partialorder %v135, 8.507059e+37
    %v137 = vand.u32 %v110, 2147483648
    %v138 = vor.u32 1.1754944e-38, %v137
    %v139 = vsel %vm136, %v138, %v134
    %v140 = vmul.f32 1.0, %v139
    %142 = vset.pattern.permute.xlu0 0
    %143 = vperm.xlu0 %142, %v125
    %v144 = vpop.permute.xlu0 %143
    %146 = vset.pattern.permute.xlu0 0
    %147 = vperm.xlu0 %146, %v140
    %v148 = vpop.permute.xlu0 %147
    %v150 = vunpack.c.l.s4 839922192
    %v151 = vunpack.c.0.s8 %v150
    %v152 = vperm.slane %v144, %v151
    %v154 = vunpack.c.l.s4 839922192
    %v155 = vunpack.c.0.s8 %v154
    %v156 = vperm.slane %v148, %v155
    %v159 = vmul.f32 %v41, %v152
    %v160 = vmul.f32 %v42, %v156
    %161 = vst [vmem:[#allocation8] sm:$0xff] %v159
    %162 = vst [vmem:[#allocation8 + $0x8] sm:$0xff] %v160
    // Predicated region
    $region18: #{tpu_custom_call.1} parent=1 // pred_check
      _
    $region19: #{tpu_custom_call.1} parent=1 // pred_check_branch
      %164 = sbr.rel (0) target = $region21
    $region20: #{tpu_custom_call.1} parent=1 // pred_region
      %166 = vsyncadd [#allocation5], 0
      %s167 = sshll.u32 [#allocation8], 4
      %s168 = int_to_ptr.vmem [resolvable:$true] %s167
      %s169 = sshll.u32 %s2, 4
      %s170 = int_to_ptr.hbm [resolvable:$true] %s169
      %175 = dma.vmem_to_hbm [thread:$0]  %s168, 256, %s170, [#allocation5], 128, 128, 8
    $region21: #{tpu_custom_call.1} parent=1 // pred_fallthru
      _
    // Predicated region
    $region22: #{tpu_custom_call.1} parent=1 // pred_check
      _
    $region23: #{tpu_custom_call.1} parent=1 // pred_check_branch
      %177 = sbr.rel (0) target = $region25
    $region24: #{tpu_custom_call.1} parent=1 // pred_region
      %179 = dma.done [#allocation5], 256
    $region25: #{tpu_custom_call.1} parent=1 // pred_fallthru
      _
    %180 = vsyncpa [#allocation4], 1
    %181 = vsyncpa [#allocation5], 1
    %182 = vsyncpa [#allocation6], 1

</llo_original>
